<compile_context>
chip_gen: v6e
topology: v6e:2x2x1
jax: 0.10.0
libtpu: 0.0.40
codegen_flags: <defaults>
</compile_context>

<pallas_src>
import functools
import math

import numpy as np
import jax
import jax.numpy as jnp
from jax.experimental import pallas as pl
from jax.experimental.pallas import tpu as pltpu


def _f1_stats_kernel(pred_ref, gt_ref, out_ref, *, B, F, Bb, Ft, mask_b, mask_f):
    """Partial precision/recall statistics for one (Bb, Ft, T) tile.

    out_ref (SMEM, shape (1, 4)):
      [0] relevant  = sum over nonzero(pred) of edge-shifted gt   (Precision num.)
      [1] n_pred    = #nonzero(pred)                              (Precision den.)
      [2] retrieved = sum over nonzero(gt)   of edge-shifted pred (Recall num.)
      [3] n_gt      = #nonzero(gt)                                (Recall den.)
    """
    bi = pl.program_id(0)
    fi = pl.program_id(1)

    pred = pred_ref[...]          # (Bb, Ft, T), caller's native dtype (no HBM upcast)
    gt = gt_ref[...]

    # Boundary blocks (grid does not divide evenly): zero the padded rows so
    # they drop out of every reduction.  Only traced when actually needed.
    if mask_b or mask_f:
        valid = None
        if mask_b:
            b_idx = jax.lax.broadcasted_iota(jnp.int32, (Bb, 1, 1), 0) + bi * Bb
            valid = b_idx < B
        if mask_f:
            f_idx = jax.lax.broadcasted_iota(jnp.int32, (1, Ft, 1), 1) + fi * Ft
            vf = f_idx < F
            valid = vf if valid is None else (valid & vf)
        zero = jnp.zeros((), pred.dtype)
        pred = jnp.where(valid, pred, zero)
        gt = jnp.where(valid, gt, zero)

    # One compare + one cast per input, reused by every reduction below.
    pred_f = (pred != 0).astype(jnp.float32)    # nonzero mask of predictions
    gt_f = (gt != 0).astype(jnp.float32)        # nonzero mask of ground truth
    pred_v = pred.astype(jnp.float32)           # values (torch sums raw values)
    gt_v = gt.astype(jnp.float32)

    # ---- base (unshifted) terms over the whole tile: the hot path ----
    rel = jnp.sum(pred_f * gt_v)
    ret = jnp.sum(gt_f * pred_v)
    n_pred = jnp.sum(pred_f)
    n_gt = jnp.sum(gt_f)

    # ---- edge corrections (one row of T and one column of Ft per tile) ----
    # A nonzero of the "query" at global (f, t) samples the other tensor at
    # (f + (f == 0), t + (t == 0)); the base sums are correct everywhere else.
    T = pred.shape[-1]
    t_row = jax.lax.broadcasted_iota(jnp.int32, (1, 1, T), 2)            # lane iota
    f_ge1 = ((jax.lax.broadcasted_iota(jnp.int32, (1, Ft, 1), 1)
              + fi * Ft) >= 1).astype(jnp.float32)                       # global f >= 1
    on_first_f_block = (fi == 0).astype(jnp.float32)

    def edge_fix(q_f, o_v):
        # global row f == 0 (only lives in F block 0): target is o[1, t + (t==0)]
        q0 = q_f[:, 0:1, :]                                 # (Bb, 1, T)
        o0, o1 = o_v[:, 0:1, :], o_v[:, 1:2, :]
        o1s = jnp.where(t_row == 0, o_v[:, 1:2, 1:2], o1)   # handles the (0, 0) corner
        row_fix = jnp.sum(q0 * (o1s - o0)) * on_first_f_block
        # column t == 0, rows with global f >= 1: target is o[f, 1]
        qc = q_f[:, :, 0:1] * f_ge1                         # (Bb, Ft, 1)
        col_fix = jnp.sum(qc * (o_v[:, :, 1:2] - o_v[:, :, 0:1]))
        return row_fix + col_fix

    rel = rel + edge_fix(pred_f, gt_v)
    ret = ret + edge_fix(gt_f, pred_v)

    out_ref[0, 0] = rel
    out_ref[0, 1] = n_pred
    out_ref[0, 2] = ret
    out_ref[0, 3] = n_gt


def f1_score(predicted, gt, *, target_block_elems=512 * 1024):
    """JAX/Pallas equivalent of F1score.forward (returns a scalar float32)."""
    assert predicted.shape == gt.shape and predicted.ndim == 3
    assert predicted.dtype == gt.dtype
    B, F, T = predicted.shape
    assert F >= 2 and T >= 2, "edge handling (like the torch code) needs F, T >= 2"

    itemsize = jnp.dtype(predicted.dtype).itemsize
    plane = F * T

    # ---- block selection (memory-bound: big lane-dense tiles, few steps) ----
    if plane <= target_block_elems:
        # whole (F, T) planes per step; fuse several batch rows per block.
        # (tiny inputs collapse to a single grid step)
        Ft = F
        Bb = max(1, min(B, target_block_elems // plane))
    else:
        # plane too large for one block: tile F (multiple of 8 per (8,128) rule).
        Bb = 1
        Ft = min(F, max(8, ((target_block_elems // T) // 8) * 8))
    NB = pl.cdiv(B, Bb)
    NF = pl.cdiv(F, Ft)
    mask_b = (B % Bb) != 0
    mask_f = (F % Ft) != 0

    kernel = functools.partial(
        _f1_stats_kernel, B=B, F=F, Bb=Bb, Ft=Ft, mask_b=mask_b, mask_f=mask_f)

    stats = pl.pallas_call(
        kernel,
        out_shape=jax.ShapeDtypeStruct((NB * NF, 4), jnp.float32),
        grid=(NB, NF),
        in_specs=[
            pl.BlockSpec((Bb, Ft, T), lambda bi, fi: (bi, fi, 0)),
            pl.BlockSpec((Bb, Ft, T), lambda bi, fi: (bi, fi, 0)),
        ],
        out_specs=pl.BlockSpec((1, 4), lambda bi, fi: (bi * NF + fi, 0),
                               memory_space=pltpu.MemorySpace.SMEM),
        compiler_params=pltpu.CompilerParams(
            # Every grid step writes its own output row -> both axes are
            # independent; lets v7x shard either axis across its two TCs.
            dimension_semantics=("parallel", "parallel"),
            # <= 48 MiB: headroom on v7x (64 MiB physical), raises the
            # v5e/v6e scoped default so the fused blocks + f32 temps fit.
            vmem_limit_bytes=48 * 1024 * 1024,
        ),
        cost_estimate=pl.CostEstimate(
            flops=12 * B * F * T,
            transcendentals=0,
            bytes_accessed=2 * B * F * T * itemsize + NB * NF * 4 * 4,
        ),
    )(predicted, gt)

    totals = jnp.sum(stats, axis=0)   # tiny (NB*NF, 4) -> (4,) combine in XLA
    relevant, n_pred, retrieved, n_gt = totals[0], totals[1], totals[2], totals[3]

    # Precision / Recall return 0.0 when there are no nonzero entries.
    p = jnp.where(n_pred > 0, relevant / jnp.maximum(n_pred, 1.0), 0.0)
    r = jnp.where(n_gt > 0, retrieved / jnp.maximum(n_gt, 1.0), 0.0)
    s = p + r
    # math.isclose(p + r, 0.0) with default abs_tol is an exact-zero test.
    return jnp.where(s == 0.0, 0.0, 2.0 * p * r / jnp.where(s == 0.0, 1.0, s))


# ------------------------- reference (host, numpy) -------------------------
def _f1_reference(predicted, gt):
    """Direct numpy transcription of the torch loops, for verification."""
    kernel = np.array([[0, 0, 0], [0, 1, 0], [0, 0, 0]], dtype=np.float64)

    def score(a, b):
        idx = np.argwhere(a != 0)
        if len(idx) == 0:
            return 0.0
        F, T = a.shape[1], a.shape[2]
        acc = 0.0
        for batch, f, t in idx:
            if t == 0:
                if f == 0:
                    acc += np.sum(b[batch, f:f + 2, t:t + 2] * kernel[:2, :2])
                elif f + 1 >= F:
                    acc += np.sum(b[batch, f - 1:f + 1, t:t + 2] * kernel[:2, :2])
                else:
                    acc += np.sum(b[batch, f - 1:f + 2, t:t + 2] * kernel[:, :2])
            elif t + 1 >= T:
                if f == 0:
                    acc += np.sum(b[batch, f:f + 2, t - 1:t + 1] * kernel[:2, :2])
                elif f + 1 >= F:
                    acc += np.sum(b[batch, f - 1:f + 1, t - 1:t + 1] * kernel[:2, :2])
                else:
                    acc += np.sum(b[batch, f - 1:f + 2, t - 1:t + 1] * kernel[:, :2])
            elif f == 0:
                acc += np.sum(b[batch, f:f + 2, t - 1:t + 2] * kernel[:2, :])
            elif f + 1 >= F:
                acc += np.sum(b[batch, f - 1:f + 1, t - 1:t + 2] * kernel[:2, :])
            else:
                acc += np.sum(b[batch, f - 1:f + 2, t - 1:t + 2] * kernel)
        return acc / len(idx)

    p = score(predicted, gt)
    r = score(gt, predicted)
    if math.isclose(p + r, 0.0):
        return 0.0
    return 2.0 * p * r / (p + r)


if __name__ == "__main__":
    key = jax.random.PRNGKey(0)

    def run_case(B, F, T, dtype=jnp.float32, density=0.08, **kw):
        k1, k2 = jax.random.split(jax.random.fold_in(key, B * 100003 + F * 131 + T))
        pred = (jax.random.uniform(k1, (B, F, T)) < density).astype(dtype)
        gt = (jax.random.uniform(k2, (B, F, T)) < density).astype(dtype)
        out = jax.block_until_ready(f1_score(pred, gt, **kw))
        ref = _f1_reference(np.asarray(pred, dtype=np.float64),
                            np.asarray(gt, dtype=np.float64))
        assert abs(float(out) - ref) < 1e-5, ((B, F, T), float(out), ref)
        return pred, gt

    # (batch, frequency, time) binary peak masks — collapses to one grid step.
    pred, gt = run_case(2, 16, 128)

    # multi-block path: F-tiling with a partial last F block (masked rows).
    run_case(3, 20, 128, target_block_elems=1024)

    # batched-B path with a partial trailing batch block (masked rows).
    run_case(5, 8, 128, target_block_elems=2048)

    # degenerate case: no predicted peaks -> precision = recall = F1 = 0.
    f1_zero = jax.block_until_ready(f1_score(jnp.zeros_like(pred), gt))
    assert abs(float(f1_zero)) < 1e-7, float(f1_zero)

    print("KERNEL_OK")
</pallas_src>

<mosaic_0001>
module attributes {stable_mosaic.version = 11 : i64} {
  func.func @_f1_stats_kernel(%arg0: i32, %arg1: i32, %arg2: memref<2x16x128xf32, #tpu.memory_space<vmem>>, %arg3: memref<2x16x128xf32, #tpu.memory_space<vmem>>, %arg4: memref<1x4xf32, #tpu.memory_space<smem>>) attributes {dimension_semantics = [#tpu.dimension_semantics<parallel>, #tpu.dimension_semantics<parallel>], iteration_bounds = array<i64: 1, 1>, scalar_prefetch = 0 : i64, scratch_operands = 0 : i64, tpu.core_type = #tpu.core_type<tc>, window_params = [{transform_indices = @transform_0, window_bounds = array<i64: 2, 16, 128>}, {transform_indices = @transform_1, window_bounds = array<i64: 2, 16, 128>}, {transform_indices = @transform_2, window_bounds = array<i64: 1, 4>}]} {
    %c0 = arith.constant 0 : index
    %c0_0 = arith.constant 0 : index
    %c0_1 = arith.constant 0 : index
    %0 = vector.load %arg2[%c0, %c0_0, %c0_1] : memref<2x16x128xf32, #tpu.memory_space<vmem>>, vector<2x16x128xf32>
    %c0_2 = arith.constant 0 : index
    %c0_3 = arith.constant 0 : index
    %c0_4 = arith.constant 0 : index
    %1 = vector.load %arg3[%c0_2, %c0_3, %c0_4] : memref<2x16x128xf32, #tpu.memory_space<vmem>>, vector<2x16x128xf32>
    %cst = arith.constant 0.000000e+00 : f32
    %2 = vector.broadcast %cst : f32 to vector<2x16x128xf32>
    %3 = arith.cmpf one, %0, %2 : vector<2x16x128xf32>
    %4 = arith.extui %3 : vector<2x16x128xi1> to vector<2x16x128xi32>
    %5 = arith.sitofp %4 : vector<2x16x128xi32> to vector<2x16x128xf32>
    %cst_5 = arith.constant 0.000000e+00 : f32
    %6 = vector.broadcast %cst_5 : f32 to vector<2x16x128xf32>
    %7 = arith.cmpf one, %1, %6 : vector<2x16x128xf32>
    %8 = arith.extui %7 : vector<2x16x128xi1> to vector<2x16x128xi32>
    %9 = arith.sitofp %8 : vector<2x16x128xi32> to vector<2x16x128xf32>
    %10 = arith.mulf %5, %1 : vector<2x16x128xf32>
    %11 = vector.shape_cast %10 : vector<2x16x128xf32> to vector<1x2x16x128xf32>
    %cst_6 = arith.constant dense<0.000000e+00> : vector<1xf32>
    %12 = vector.multi_reduction <add>, %11, %cst_6 [1, 2, 3] : vector<1x2x16x128xf32> to vector<1xf32>
    %13 = vector.shape_cast %12 : vector<1xf32> to vector<1x1x1x1xf32>
    %14 = vector.extract %13[0, 0, 0, 0] : f32 from vector<1x1x1x1xf32>
    %15 = arith.mulf %9, %0 : vector<2x16x128xf32>
    %16 = vector.shape_cast %15 : vector<2x16x128xf32> to vector<1x2x16x128xf32>
    %cst_7 = arith.constant dense<0.000000e+00> : vector<1xf32>
    %17 = vector.multi_reduction <add>, %16, %cst_7 [1, 2, 3] : vector<1x2x16x128xf32> to vector<1xf32>
    %18 = vector.shape_cast %17 : vector<1xf32> to vector<1x1x1x1xf32>
    %19 = vector.extract %18[0, 0, 0, 0] : f32 from vector<1x1x1x1xf32>
    %20 = vector.shape_cast %5 : vector<2x16x128xf32> to vector<1x2x16x128xf32>
    %cst_8 = arith.constant dense<0.000000e+00> : vector<1xf32>
    %21 = vector.multi_reduction <add>, %20, %cst_8 [1, 2, 3] : vector<1x2x16x128xf32> to vector<1xf32>
    %22 = vector.shape_cast %21 : vector<1xf32> to vector<1x1x1x1xf32>
    %23 = vector.extract %22[0, 0, 0, 0] : f32 from vector<1x1x1x1xf32>
    %24 = vector.shape_cast %9 : vector<2x16x128xf32> to vector<1x2x16x128xf32>
    %cst_9 = arith.constant dense<0.000000e+00> : vector<1xf32>
    %25 = vector.multi_reduction <add>, %24, %cst_9 [1, 2, 3] : vector<1x2x16x128xf32> to vector<1xf32>
    %26 = vector.shape_cast %25 : vector<1xf32> to vector<1x1x1x1xf32>
    %27 = vector.extract %26[0, 0, 0, 0] : f32 from vector<1x1x1x1xf32>
    %28 = tpu.iota {dimensions = array<i32: 2>} : vector<1x1x128xi32>
    %29 = tpu.iota {dimensions = array<i32: 1>} : vector<1x16x1xi32>
    %c16_i32 = arith.constant 16 : i32
    %30 = arith.muli %arg1, %c16_i32 : i32
    %31 = vector.broadcast %30 : i32 to vector<1x16x1xi32>
    %32 = arith.addi %29, %31 : vector<1x16x1xi32>
    %c1_i32 = arith.constant 1 : i32
    %33 = vector.broadcast %c1_i32 : i32 to vector<1x16x1xi32>
    %34 = arith.cmpi sge, %32, %33 : vector<1x16x1xi32>
    %35 = arith.extui %34 : vector<1x16x1xi1> to vector<1x16x1xi32>
    %36 = arith.sitofp %35 : vector<1x16x1xi32> to vector<1x16x1xf32>
    %c0_i32 = arith.constant 0 : i32
    %37 = arith.cmpi eq, %arg1, %c0_i32 : i32
    %38 = arith.extui %37 : i1 to i32
    %39 = arith.sitofp %38 : i32 to f32
    %40 = vector.extract_strided_slice %5 {offsets = [0, 0, 0], sizes = [2, 1, 128], strides = [1, 1, 1]} : vector<2x16x128xf32> to vector<2x1x128xf32>
    %41 = vector.extract_strided_slice %1 {offsets = [0, 0, 0], sizes = [2, 1, 128], strides = [1, 1, 1]} : vector<2x16x128xf32> to vector<2x1x128xf32>
    %42 = vector.extract_strided_slice %1 {offsets = [0, 1, 0], sizes = [2, 1, 128], strides = [1, 1, 1]} : vector<2x16x128xf32> to vector<2x1x128xf32>
    %c0_i32_10 = arith.constant 0 : i32
    %43 = vector.broadcast %c0_i32_10 : i32 to vector<1x1x128xi32>
    %44 = arith.cmpi eq, %28, %43 : vector<1x1x128xi32>
    %45 = vector.extract_strided_slice %1 {offsets = [0, 1, 1], sizes = [2, 1, 1], strides = [1, 1, 1]} : vector<2x16x128xf32> to vector<2x1x1xf32>
    %46 = vector.shape_cast %44 : vector<1x1x128xi1> to vector<1x1x128xi1>
    %47 = vector.broadcast %46 : vector<1x1x128xi1> to vector<2x1x128xi1>
    %48 = vector.shape_cast %45 : vector<2x1x1xf32> to vector<2x1x1xf32>
    %49 = vector.broadcast %48 : vector<2x1x1xf32> to vector<2x1x128xf32>
    %50 = arith.select %47, %49, %42 : vector<2x1x128xi1>, vector<2x1x128xf32>
    %51 = arith.subf %50, %41 : vector<2x1x128xf32>
    %52 = arith.mulf %40, %51 : vector<2x1x128xf32>
    %53 = vector.shape_cast %52 : vector<2x1x128xf32> to vector<1x2x1x128xf32>
    %cst_11 = arith.constant dense<0.000000e+00> : vector<1xf32>
    %54 = vector.multi_reduction <add>, %53, %cst_11 [1, 2, 3] : vector<1x2x1x128xf32> to vector<1xf32>
    %55 = vector.shape_cast %54 : vector<1xf32> to vector<1x1x1x1xf32>
    %56 = vector.extract %55[0, 0, 0, 0] : f32 from vector<1x1x1x1xf32>
    %57 = arith.mulf %56, %39 : f32
    %58 = vector.extract_strided_slice %5 {offsets = [0, 0, 0], sizes = [2, 16, 1], strides = [1, 1, 1]} : vector<2x16x128xf32> to vector<2x16x1xf32>
    %59 = vector.broadcast %36 : vector<1x16x1xf32> to vector<2x16x1xf32>
    %60 = arith.mulf %58, %59 : vector<2x16x1xf32>
    %61 = vector.extract_strided_slice %1 {offsets = [0, 0, 1], sizes = [2, 16, 1], strides = [1, 1, 1]} : vector<2x16x128xf32> to vector<2x16x1xf32>
    %62 = vector.extract_strided_slice %1 {offsets = [0, 0, 0], sizes = [2, 16, 1], strides = [1, 1, 1]} : vector<2x16x128xf32> to vector<2x16x1xf32>
    %63 = arith.subf %61, %62 : vector<2x16x1xf32>
    %64 = arith.mulf %60, %63 : vector<2x16x1xf32>
    %65 = vector.shape_cast %64 : vector<2x16x1xf32> to vector<1x2x16x1xf32>
    %cst_12 = arith.constant dense<0.000000e+00> : vector<1xf32>
    %66 = vector.multi_reduction <add>, %65, %cst_12 [1, 2, 3] : vector<1x2x16x1xf32> to vector<1xf32>
    %67 = vector.shape_cast %66 : vector<1xf32> to vector<1x1x1x1xf32>
    %68 = vector.extract %67[0, 0, 0, 0] : f32 from vector<1x1x1x1xf32>
    %69 = arith.addf %57, %68 : f32
    %70 = arith.addf %14, %69 : f32
    %71 = vector.extract_strided_slice %9 {offsets = [0, 0, 0], sizes = [2, 1, 128], strides = [1, 1, 1]} : vector<2x16x128xf32> to vector<2x1x128xf32>
    %72 = vector.extract_strided_slice %0 {offsets = [0, 0, 0], sizes = [2, 1, 128], strides = [1, 1, 1]} : vector<2x16x128xf32> to vector<2x1x128xf32>
    %73 = vector.extract_strided_slice %0 {offsets = [0, 1, 0], sizes = [2, 1, 128], strides = [1, 1, 1]} : vector<2x16x128xf32> to vector<2x1x128xf32>
    %c0_i32_13 = arith.constant 0 : i32
    %74 = vector.broadcast %c0_i32_13 : i32 to vector<1x1x128xi32>
    %75 = arith.cmpi eq, %28, %74 : vector<1x1x128xi32>
    %76 = vector.extract_strided_slice %0 {offsets = [0, 1, 1], sizes = [2, 1, 1], strides = [1, 1, 1]} : vector<2x16x128xf32> to vector<2x1x1xf32>
    %77 = vector.shape_cast %75 : vector<1x1x128xi1> to vector<1x1x128xi1>
    %78 = vector.broadcast %77 : vector<1x1x128xi1> to vector<2x1x128xi1>
    %79 = vector.shape_cast %76 : vector<2x1x1xf32> to vector<2x1x1xf32>
    %80 = vector.broadcast %79 : vector<2x1x1xf32> to vector<2x1x128xf32>
    %81 = arith.select %78, %80, %73 : vector<2x1x128xi1>, vector<2x1x128xf32>
    %82 = arith.subf %81, %72 : vector<2x1x128xf32>
    %83 = arith.mulf %71, %82 : vector<2x1x128xf32>
    %84 = vector.shape_cast %83 : vector<2x1x128xf32> to vector<1x2x1x128xf32>
    %cst_14 = arith.constant dense<0.000000e+00> : vector<1xf32>
    %85 = vector.multi_reduction <add>, %84, %cst_14 [1, 2, 3] : vector<1x2x1x128xf32> to vector<1xf32>
    %86 = vector.shape_cast %85 : vector<1xf32> to vector<1x1x1x1xf32>
    %87 = vector.extract %86[0, 0, 0, 0] : f32 from vector<1x1x1x1xf32>
    %88 = arith.mulf %87, %39 : f32
    %89 = vector.extract_strided_slice %9 {offsets = [0, 0, 0], sizes = [2, 16, 1], strides = [1, 1, 1]} : vector<2x16x128xf32> to vector<2x16x1xf32>
    %90 = vector.broadcast %36 : vector<1x16x1xf32> to vector<2x16x1xf32>
    %91 = arith.mulf %89, %90 : vector<2x16x1xf32>
    %92 = vector.extract_strided_slice %0 {offsets = [0, 0, 1], sizes = [2, 16, 1], strides = [1, 1, 1]} : vector<2x16x128xf32> to vector<2x16x1xf32>
    %93 = vector.extract_strided_slice %0 {offsets = [0, 0, 0], sizes = [2, 16, 1], strides = [1, 1, 1]} : vector<2x16x128xf32> to vector<2x16x1xf32>
    %94 = arith.subf %92, %93 : vector<2x16x1xf32>
    %95 = arith.mulf %91, %94 : vector<2x16x1xf32>
    %96 = vector.shape_cast %95 : vector<2x16x1xf32> to vector<1x2x16x1xf32>
    %cst_15 = arith.constant dense<0.000000e+00> : vector<1xf32>
    %97 = vector.multi_reduction <add>, %96, %cst_15 [1, 2, 3] : vector<1x2x16x1xf32> to vector<1xf32>
    %98 = vector.shape_cast %97 : vector<1xf32> to vector<1x1x1x1xf32>
    %99 = vector.extract %98[0, 0, 0, 0] : f32 from vector<1x1x1x1xf32>
    %100 = arith.addf %88, %99 : f32
    %101 = arith.addf %19, %100 : f32
    %c0_16 = arith.constant 0 : index
    %c0_17 = arith.constant 0 : index
    %102 = memref.load %arg4[%c0_16, %c0_17] : memref<1x4xf32, #tpu.memory_space<smem>>
    memref.store %70, %arg4[%c0_16, %c0_17] : memref<1x4xf32, #tpu.memory_space<smem>>
    %c0_18 = arith.constant 0 : index
    %c1 = arith.constant 1 : index
    %103 = memref.load %arg4[%c0_18, %c1] : memref<1x4xf32, #tpu.memory_space<smem>>
    memref.store %23, %arg4[%c0_18, %c1] : memref<1x4xf32, #tpu.memory_space<smem>>
    %c0_19 = arith.constant 0 : index
    %c2 = arith.constant 2 : index
    %104 = memref.load %arg4[%c0_19, %c2] : memref<1x4xf32, #tpu.memory_space<smem>>
    memref.store %101, %arg4[%c0_19, %c2] : memref<1x4xf32, #tpu.memory_space<smem>>
    %c0_20 = arith.constant 0 : index
    %c3 = arith.constant 3 : index
    %105 = memref.load %arg4[%c0_20, %c3] : memref<1x4xf32, #tpu.memory_space<smem>>
    memref.store %27, %arg4[%c0_20, %c3] : memref<1x4xf32, #tpu.memory_space<smem>>
    return
  }
  func.func @transform_0(%arg0: i32, %arg1: i32) -> (i32, i32, i32) {
    %c0_i32 = arith.constant 0 : i32
    %c0_i32_0 = arith.constant 0 : i32
    return %arg0, %arg1, %c0_i32 : i32, i32, i32
  }
  func.func @transform_1(%arg0: i32, %arg1: i32) -> (i32, i32, i32) {
    %c0_i32 = arith.constant 0 : i32
    %c0_i32_0 = arith.constant 0 : i32
    return %arg0, %arg1, %c0_i32 : i32, i32, i32
  }
  func.func @transform_2(%arg0: i32, %arg1: i32) -> (i32, i32) {
    %c1_i32 = arith.constant 1 : i32
    %0 = arith.muli %arg0, %c1_i32 : i32
    %1 = arith.addi %0, %arg1 : i32
    %c0_i32 = arith.constant 0 : i32
    %c0_i32_0 = arith.constant 0 : i32
    return %1, %c0_i32 : i32, i32
  }
}

</mosaic_0001>

<llo_original>
// kernel: tpu_custom_call.1
$region0: #{tpu_custom_call.1}
  #allocation0 [shape = 'u32[]', space=smem, size = 0x4, offset = 0x4, fixed_abs, tag = 'smem constant byte address 0x4 - core index']
  #allocation1 [shape = 'u32[144,128]{1,0:T(1,128)}', space=vmem, size = 0x12000, scoped, tag = 'internal scratch']
  %s0 = inlined_call_operand.hbm [shape: f32[2,16,128], index: 0, kind: input, shape index: {}]
  %s1 = inlined_call_operand.hbm [shape: f32[2,16,128], index: 1, kind: input, shape index: {}]
  %s2 = inlined_call_operand.hbm [shape: f32[1,4], index: 2, kind: output, shape index: {}]
  %s3 = sld [smem:[#allocation0]]
  $region26: #{tpu_custom_call.1} parent=0
    _
  %s5 = ssub.s32 1, %s3
  %s6 = scalar_select 0, %s5, %s3
  $region1: #{tpu_custom_call.1} parent=0
    #allocation2 [shape = 'u8[16384]{0}', space=vmem, size = 0x4000, scoped, tag = 'input window, operand 0, single buffered']
    #allocation3 [shape = 's32[1]{0}', space=sflag, size = 0x4, scoped, tag = 'scoped memory for tpu_custom_call.1']
    #allocation4 [shape = 's32[1]{0}', space=sflag, size = 0x4, scoped, tag = 'scoped memory for tpu_custom_call.1']
    #allocation5 [shape = 'u8[16384]{0}', space=vmem, size = 0x4000, scoped, tag = 'input window, operand 1, single buffered']
    #allocation6 [shape = 's32[1]{0}', space=sflag, size = 0x4, scoped, tag = 'scoped memory for tpu_custom_call.1']
    #allocation7 [shape = 'u8[512]{0}', space=smem, size = 0x200, scoped, tag = 'output window, operand 0, single buffered']
    %7 = vsyncpa [#allocation3], 0
    %8 = vsyncpa [#allocation6], 0
    %9 = vsyncpa [#allocation4], 0
    // Predicated region
    $region2: #{tpu_custom_call.1} parent=1 // pred_check
      _
    $region3: #{tpu_custom_call.1} parent=1 // pred_check_branch
      %11 = sbr.rel (0) target = $region5
    $region4: #{tpu_custom_call.1} parent=1 // pred_region
      %s13 = ssub.s32 512, 512
      %14 = vsyncadd [#allocation3], %s13
      %s15 = sshll.u32 [#allocation2], 4
      %s16 = int_to_ptr.vmem [resolvable:$true] %s15
      %21 = dma.hbm_to_vmem [thread:$0]  %s0, 512, %s16, [#allocation3], 128, 128, 8
    $region5: #{tpu_custom_call.1} parent=1 // pred_fallthru
      _
    // Predicated region
    $region6: #{tpu_custom_call.1} parent=1 // pred_check
      _
    $region7: #{tpu_custom_call.1} parent=1 // pred_check_branch
      %23 = sbr.rel (0) target = $region9
    $region8: #{tpu_custom_call.1} parent=1 // pred_region
      %s25 = ssub.s32 512, 512
      %26 = vsyncadd [#allocation6], %s25
      %s27 = sshll.u32 [#allocation5], 4
      %s28 = int_to_ptr.vmem [resolvable:$true] %s27
      %33 = dma.hbm_to_vmem [thread:$0]  %s1, 512, %s28, [#allocation6], 128, 128, 8
    $region9: #{tpu_custom_call.1} parent=1 // pred_fallthru
      _
    // Predicated region
    $region10: #{tpu_custom_call.1} parent=1 // pred_check
      _
    $region11: #{tpu_custom_call.1} parent=1 // pred_check_branch
      %35 = sbr.rel (0) target = $region13
    $region12: #{tpu_custom_call.1} parent=1 // pred_region
      %36 = dma.done [#allocation3], 512
    $region13: #{tpu_custom_call.1} parent=1 // pred_fallthru
      _
    // Predicated region
    $region14: #{tpu_custom_call.1} parent=1 // pred_check
      _
    $region15: #{tpu_custom_call.1} parent=1 // pred_check_branch
      %38 = sbr.rel (0) target = $region17
    $region16: #{tpu_custom_call.1} parent=1 // pred_region
      %39 = dma.done [#allocation6], 512
    $region17: #{tpu_custom_call.1} parent=1 // pred_fallthru
      _
    %s40 = sadd.s32 0, 0
    %v41 = vld [vmem:[#allocation2] sm:$0xff]
    %v42 = vld [vmem:[#allocation2 + $0x8] sm:$0xff]
    %v43 = vld [vmem:[#allocation2 + $0x10] sm:$0xff]
    %v44 = vld [vmem:[#allocation2 + $0x18] sm:$0xff]
    %v45 = vld [vmem:[#allocation5] sm:$0xff]
    %v46 = vld [vmem:[#allocation5 + $0x8] sm:$0xff]
    %v47 = vld [vmem:[#allocation5 + $0x10] sm:$0xff]
    %v48 = vld [vmem:[#allocation5 + $0x18] sm:$0xff]
    %vm49 = vcmp.ne.f32.partialorder %v41, 0.0
    %vm50 = vcmp.ne.f32.partialorder %v42, 0.0
    %vm51 = vcmp.ne.f32.partialorder %v43, 0.0
    %vm52 = vcmp.ne.f32.partialorder %v44, 0.0
    %v53 = vsel %vm49, 1, 0
    %v54 = vsel %vm50, 1, 0
    %v55 = vsel %vm51, 1, 0
    %v56 = vsel %vm52, 1, 0
    %v57 = vcvt.s32.f32 %v53
    %v58 = vcvt.s32.f32 %v54
    %v59 = vcvt.s32.f32 %v55
    %v60 = vcvt.s32.f32 %v56
    %vm61 = vcmp.ne.f32.partialorder %v45, 0.0
    %vm62 = vcmp.ne.f32.partialorder %v46, 0.0
    %vm63 = vcmp.ne.f32.partialorder %v47, 0.0
    %vm64 = vcmp.ne.f32.partialorder %v48, 0.0
    %v65 = vsel %vm61, 1, 0
    %v66 = vsel %vm62, 1, 0
    %v67 = vsel %vm63, 1, 0
    %v68 = vsel %vm64, 1, 0
    %v69 = vcvt.s32.f32 %v65
    %v70 = vcvt.s32.f32 %v66
    %v71 = vcvt.s32.f32 %v67
    %v72 = vcvt.s32.f32 %v68
    %v73 = vmul.f32 %v57, %v45
    %v74 = vmul.f32 %v58, %v46
    %v75 = vmul.f32 %v59, %v47
    %v76 = vmul.f32 %v60, %v48
    %v77 = vadd.f32 %v73, %v74
    %v78 = vadd.f32 %v77, %v75
    %v79 = vadd.f32 %v78, %v76
    %80 = vadd.xlane.f32.xlu0 %v79
    %v81 = vpop.xlane.xlu0 %80
    %v82 = vrot.slane %v81, 4
    %v83 = vadd.f32 %v81, %v82
    %v84 = vrot.slane %v83, 2
    %v85 = vadd.f32 %v83, %v84
    %v86 = vrot.slane %v85, 1
    %v87 = vadd.f32 %v85, %v86
    %s88 = vtos %v87
    %v89 = vmul.f32 %v69, %v41
    %v90 = vmul.f32 %v70, %v42
    %v91 = vmul.f32 %v71, %v43
    %v92 = vmul.f32 %v72, %v44
    %v93 = vadd.f32 %v89, %v90
    %v94 = vadd.f32 %v93, %v91
    %v95 = vadd.f32 %v94, %v92
    %96 = vadd.xlane.f32.xlu0 %v95
    %v97 = vpop.xlane.xlu0 %96
    %v98 = vrot.slane %v97, 4
    %v99 = vadd.f32 %v97, %v98
    %v100 = vrot.slane %v99, 2
    %v101 = vadd.f32 %v99, %v100
    %v102 = vrot.slane %v101, 1
    %v103 = vadd.f32 %v101, %v102
    %s104 = vtos %v103
    %v105 = vadd.f32 %v57, %v58
    %v106 = vadd.f32 %v105, %v59
    %v107 = vadd.f32 %v106, %v60
    %108 = vadd.xlane.f32.xlu0 %v107
    %v109 = vpop.xlane.xlu0 %108
    %v110 = vrot.slane %v109, 4
    %v111 = vadd.f32 %v109, %v110
    %v112 = vrot.slane %v111, 2
    %v113 = vadd.f32 %v111, %v112
    %v114 = vrot.slane %v113, 1
    %v115 = vadd.f32 %v113, %v114
    %s116 = vtos %v115
    %v117 = vadd.f32 %v69, %v70
    %v118 = vadd.f32 %v117, %v71
    %v119 = vadd.f32 %v118, %v72
    %120 = vadd.xlane.f32.xlu0 %v119
    %v121 = vpop.xlane.xlu0 %120
    %v122 = vrot.slane %v121, 4
    %v123 = vadd.f32 %v121, %v122
    %v124 = vrot.slane %v123, 2
    %v125 = vadd.f32 %v123, %v124
    %v126 = vrot.slane %v125, 1
    %v127 = vadd.f32 %v125, %v126
    %s128 = vtos %v127
    %v129 = vlaneseq
    %v130 = vand.u32 %v129, 127
    %v131 = vlaneseq
    %v132 = vshrl.u32 %v131, 7
    %v133 = vadd.s32 %v132, 8
    %s134 = smul.u32 0, 16
    %v135 = vstv %s134
    %v136 = vadd.s32 %v132, %v135
    %v137 = vadd.s32 %v133, %v135
    %vm138 = vcmp.ge.s32.totalorder %v136, 1
    %vm139 = vcmp.ge.s32.totalorder %v137, 1
    %v140 = vsel %vm138, 1, 0
    %v141 = vsel %vm139, 1, 0
    %v142 = vcvt.s32.f32 %v140
    %v143 = vcvt.s32.f32 %v141
    %p144 = scmp.eq.s32.totalorder 0, 0
    %s145 = scalar_select %p144, 1, 0
    %s146 = scvt.s32.f32 %s145
    %vm147 = vcmp.eq.s32.totalorder %v130, 0
    %v148 = vsel %vm147, 1, 0
    %vm149 = vcmp.eq.s32.totalorder %v148, 1
    %151 = vset.pattern.permute.xlu0 1
    %152 = vperm.xlu0 %151, %v45
    %v153 = vpop.permute.xlu0 %152
    %156 = vset.pattern.permute.xlu0 1
    %157 = vperm.xlu0 %156, %v47
    %v158 = vpop.permute.xlu0 %157
    %v160 = vsel %vm149, %v153, %v45
    %v161 = vsel %vm149, %v158, %v47
    %v162 = vrot.slane %v45, 7
    %v163 = vrot.slane %v47, 7
    %v166 = vsub.f32 %v160, %v162
    %v167 = vsub.f32 %v161, %v163
    %v170 = vrot.slane %v166, 1
    %v171 = vrot.slane %v167, 1
    %v174 = vmul.f32 %v57, %v170
    %v175 = vmul.f32 %v59, %v171
    %vm176 = vcmask 1040384
    %v177 = vsel %vm176, %v174, 0.0
    %v178 = vsel %vm176, %v175, 0.0
    %v179 = vadd.f32 %v177, %v178
    %180 = vadd.xlane.f32.xlu0 %v179
    %v181 = vpop.xlane.xlu0 %180
    %v182 = vrot.slane %v181, 4
    %v183 = vadd.f32 %v181, %v182
    %v184 = vrot.slane %v183, 2
    %v185 = vadd.f32 %v183, %v184
    %v186 = vrot.slane %v185, 1
    %v187 = vadd.f32 %v185, %v186
    %s188 = vtos %v187
    %s189 = smul.f32 %s188, %s146
    %v190 = vmul.f32 %v57, %v142
    %v191 = vmul.f32 %v58, %v143
    %v192 = vmul.f32 %v59, %v142
    %v193 = vmul.f32 %v60, %v143
    %196 = vrot.lane.b32.xlu0 %v45, 1
    %v197 = vpop.permute.xlu0 %196
    %198 = vrot.lane.b32.xlu0 %v46, 1
    %v199 = vpop.permute.xlu0 %198
    %200 = vrot.lane.b32.xlu0 %v47, 1
    %v201 = vpop.permute.xlu0 %200
    %202 = vrot.lane.b32.xlu0 %v48, 1
    %v203 = vpop.permute.xlu0 %202
    %v208 = vsub.f32 %v45, %v197
    %v209 = vsub.f32 %v46, %v199
    %v210 = vsub.f32 %v47, %v201
    %v211 = vsub.f32 %v48, %v203
    %216 = vrot.lane.b32.xlu0 %v208, 127
    %v217 = vpop.permute.xlu0 %216
    %218 = vrot.lane.b32.xlu0 %v209, 127
    %v219 = vpop.permute.xlu0 %218
    %220 = vrot.lane.b32.xlu0 %v210, 127
    %v221 = vpop.permute.xlu0 %220
    %222 = vrot.lane.b32.xlu0 %v211, 127
    %v223 = vpop.permute.xlu0 %222
    %v228 = vmul.f32 %v190, %v217
    %v229 = vmul.f32 %v191, %v219
    %v230 = vmul.f32 %v192, %v221
    %v231 = vmul.f32 %v193, %v223
    %vm232 = vcmask 7168
    %v233 = vsel %vm232, %v228, 0.0
    %v234 = vsel %vm232, %v229, 0.0
    %v235 = vadd.f32 %v233, %v234
    %v236 = vsel %vm232, %v230, 0.0
    %v237 = vadd.f32 %v235, %v236
    %v238 = vsel %vm232, %v231, 0.0
    %v239 = vadd.f32 %v237, %v238
    %240 = vadd.xlane.f32.xlu0 %v239
    %v241 = vpop.xlane.xlu0 %240
    %v242 = vrot.slane %v241, 4
    %v243 = vadd.f32 %v241, %v242
    %v244 = vrot.slane %v243, 2
    %v245 = vadd.f32 %v243, %v244
    %v246 = vrot.slane %v245, 1
    %v247 = vadd.f32 %v245, %v246
    %s248 = vtos %v247
    %s249 = sadd.f32 %s189, %s248
    %s250 = sadd.f32 %s88, %s249
    %252 = vset.pattern.permute.xlu0 1
    %253 = vperm.xlu0 %252, %v41
    %v254 = vpop.permute.xlu0 %253
    %257 = vset.pattern.permute.xlu0 1
    %258 = vperm.xlu0 %257, %v43
    %v259 = vpop.permute.xlu0 %258
    %v261 = vsel %vm149, %v254, %v41
    %v262 = vsel %vm149, %v259, %v43
    %v263 = vrot.slane %v41, 7
    %v264 = vrot.slane %v43, 7
    %v267 = vsub.f32 %v261, %v263
    %v268 = vsub.f32 %v262, %v264
    %v271 = vrot.slane %v267, 1
    %v272 = vrot.slane %v268, 1
    %v275 = vmul.f32 %v69, %v271
    %v276 = vmul.f32 %v71, %v272
    %v277 = vsel %vm176, %v275, 0.0
    %v278 = vsel %vm176, %v276, 0.0
    %v279 = vadd.f32 %v277, %v278
    %280 = vadd.xlane.f32.xlu0 %v279
    %v281 = vpop.xlane.xlu0 %280
    %v282 = vrot.slane %v281, 4
    %v283 = vadd.f32 %v281, %v282
    %v284 = vrot.slane %v283, 2
    %v285 = vadd.f32 %v283, %v284
    %v286 = vrot.slane %v285, 1
    %v287 = vadd.f32 %v285, %v286
    %s288 = vtos %v287
    %s289 = smul.f32 %s288, %s146
    %v290 = vmul.f32 %v69, %v142
    %v291 = vmul.f32 %v70, %v143
    %v292 = vmul.f32 %v71, %v142
    %v293 = vmul.f32 %v72, %v143
    %296 = vrot.lane.b32.xlu0 %v41, 1
    %v297 = vpop.permute.xlu0 %296
    %298 = vrot.lane.b32.xlu0 %v42, 1
    %v299 = vpop.permute.xlu0 %298
    %300 = vrot.lane.b32.xlu0 %v43, 1
    %v301 = vpop.permute.xlu0 %300
    %302 = vrot.lane.b32.xlu0 %v44, 1
    %v303 = vpop.permute.xlu0 %302
    %v308 = vsub.f32 %v41, %v297
    %v309 = vsub.f32 %v42, %v299
    %v310 = vsub.f32 %v43, %v301
    %v311 = vsub.f32 %v44, %v303
    %316 = vrot.lane.b32.xlu0 %v308, 127
    %v317 = vpop.permute.xlu0 %316
    %318 = vrot.lane.b32.xlu0 %v309, 127
    %v319 = vpop.permute.xlu0 %318
    %320 = vrot.lane.b32.xlu0 %v310, 127
    %v321 = vpop.permute.xlu0 %320
    %322 = vrot.lane.b32.xlu0 %v311, 127
    %v323 = vpop.permute.xlu0 %322
    %v328 = vmul.f32 %v290, %v317
    %v329 = vmul.f32 %v291, %v319
    %v330 = vmul.f32 %v292, %v321
    %v331 = vmul.f32 %v293, %v323
    %v332 = vsel %vm232, %v328, 0.0
    %v333 = vsel %vm232, %v329, 0.0
    %v334 = vadd.f32 %v332, %v333
    %v335 = vsel %vm232, %v330, 0.0
    %v336 = vadd.f32 %v334, %v335
    %v337 = vsel %vm232, %v331, 0.0
    %v338 = vadd.f32 %v336, %v337
    %339 = vadd.xlane.f32.xlu0 %v338
    %v340 = vpop.xlane.xlu0 %339
    %v341 = vrot.slane %v340, 4
    %v342 = vadd.f32 %v340, %v341
    %v343 = vrot.slane %v342, 2
    %v344 = vadd.f32 %v342, %v343
    %v345 = vrot.slane %v344, 1
    %v346 = vadd.f32 %v344, %v345
    %s347 = vtos %v346
    %s348 = sadd.f32 %s289, %s347
    %s349 = sadd.f32 %s104, %s348
    %s350 = scalar_lea.smem [#allocation7], 0
    %351 = sst [smem:[%s350]] %s250
    %s352 = scalar_lea.smem [#allocation7], 1
    %353 = sst [smem:[%s352]] %s116
    %s354 = scalar_lea.smem [#allocation7], 2
    %355 = sst [smem:[%s354]] %s349
    %s356 = scalar_lea.smem [#allocation7], 3
    %357 = sst [smem:[%s356]] %s128
    // Predicated region
    $region18: #{tpu_custom_call.1} parent=1 // pred_check
      _
    $region19: #{tpu_custom_call.1} parent=1 // pred_check_branch
      %359 = sbr.rel (0) target = $region21
    $region20: #{tpu_custom_call.1} parent=1 // pred_region
      %s360 = sadd.s32 0, 0
      %s362 = ssub.s32 16, 16
      %363 = vsyncadd [#allocation4], %s362
      %s364 = smul.addr %s360, 16
      %s365 = scalar_lea.hbm %s2, %s364
      %368 = dma.smem_to_hbm [#allocation7], 16, %s365, [#allocation4]
    $region21: #{tpu_custom_call.1} parent=1 // pred_fallthru
      _
    // Predicated region
    $region22: #{tpu_custom_call.1} parent=1 // pred_check
      _
    $region23: #{tpu_custom_call.1} parent=1 // pred_check_branch
      %370 = sbr.rel (0) target = $region25
    $region24: #{tpu_custom_call.1} parent=1 // pred_region
      %371 = dma.done [#allocation4], 16
    $region25: #{tpu_custom_call.1} parent=1 // pred_fallthru
      _
    %372 = sfence
    %373 = vsyncpa [#allocation3], 1
    %374 = vsyncpa [#allocation6], 1
    %375 = vsyncpa [#allocation4], 1

</llo_original>
